<compile_context>
chip_gen: v7x
topology: tpu7x:2x2x1
jax: 0.10.0
libtpu: 0.0.40
codegen_flags: <defaults>
</compile_context>

<pallas_src>
import functools

import jax
import jax.numpy as jnp
from jax.experimental import pallas as pl
from jax.experimental.pallas import tpu as pltpu


def _round_up(n, m):
    return ((n + m - 1) // m) * m


def ge_net_kernel(x1_ref, x2_ref, x3_ref, w0a_ref, w0b_ref, w0c_ref, b0_ref,
                  w1_ref, b1_ref, wout_ref, out_ref, *, binary):
    cd = x1_ref.dtype
    tb = out_ref.shape[-1]
    # Lane-dense ones row: folds the (H, 1) bias columns into K=1 MXU
    # contractions instead of a cross-lane broadcast + VPU add.
    ones = jnp.ones((1, tb), dtype=cd)

    # hidden_layers[0]: Linear(In + Interaction + Clinical -> H0) + ReLU.
    # Three K-chunk contractions (In / Interaction / Clinical) so the wrapper
    # never materializes a concatenated activation slab.  Batch is on lanes,
    # result is (H0, tb), accumulation in f32.
    h = jnp.dot(w0a_ref[...], x1_ref[...], preferred_element_type=jnp.float32)
    h = h + jnp.dot(w0b_ref[...], x2_ref[...],
                    preferred_element_type=jnp.float32)
    h = h + jnp.dot(w0c_ref[...], x3_ref[...],
                    preferred_element_type=jnp.float32)
    h = h + jnp.dot(b0_ref[...], ones, preferred_element_type=jnp.float32)
    h = jnp.maximum(h, 0.0)                       # ReLU in f32 (v5e-safe)

    # hidden_layers[1]: Linear(H0 -> H1) + ReLU.
    h1 = jnp.dot(w1_ref[...], h.astype(cd), preferred_element_type=jnp.float32)
    h1 = h1 + jnp.dot(b1_ref[...], ones, preferred_element_type=jnp.float32)
    h1 = jnp.maximum(h1, 0.0)

    # hidden_layers[-1]: Linear(H1 -> 1, bias=False).  With batch on lanes
    # this is an M=1 matmul producing a lane-dense (1, tb) output row.
    lin = jnp.dot(wout_ref[...], h1.astype(cd),
                  preferred_element_type=jnp.float32)
    if binary:                                    # ytype == 'Binary'
        lin = jax.nn.sigmoid(lin)
    out_ref[...] = lin.astype(out_ref.dtype)


def ge_net_forward(x1, x2, x3, params, *, ytype="Binary",
                   compute_dtype=jnp.bfloat16, tile_b=4096):
    """Forward pass of GE_Net.

    params: dict with s1 (IN,), s2 (INTER,), W0 (H0, F), b0 (H0,),
    W1 (H1, H0), b1 (H1,), Wout (1, H1) — weights kept in PyTorch (out, in)
    layout, which is exactly what the batch-on-lanes kernel wants.
    """
    B, in_nodes = x1.shape
    inter_nodes = x2.shape[1]
    clin_nodes = x3.shape[1]
    F = in_nodes + inter_nodes + clin_nodes
    H0 = params["W0"].shape[0]
    H1 = params["W1"].shape[0]

    # ---- batch tiling: lane-dense tiles (multiple of 128).  Aim for >= 2
    # grid steps when the batch allows it so the "parallel" axis can shard
    # across v7x's two TensorCores; cap at tile_b to amortize the ~0.35 us
    # fixed per-grid-step overhead.  VMEM is not the limiting factor.
    B128 = _round_up(B, 128)
    tb = min(tile_b, max(128, _round_up(B128 // 2, 128)))
    Bp = _round_up(B, tb)
    num_steps = Bp // tb

    # ---- weights: fold sparse1/sparse2 scales into the first-layer weight
    # chunks in f32, then cast once to the MXU dtype.
    W0 = params["W0"].astype(jnp.float32)
    s1 = params["s1"].astype(jnp.float32)
    s2 = params["s2"].astype(jnp.float32)
    w0a = (W0[:, :in_nodes] * s1[None, :]).astype(compute_dtype)
    w0b = (W0[:, in_nodes:in_nodes + inter_nodes]
           * s2[None, :]).astype(compute_dtype)
    w0c = W0[:, in_nodes + inter_nodes:].astype(compute_dtype)
    b0 = params["b0"].reshape(H0, 1).astype(compute_dtype)
    w1 = params["W1"].astype(compute_dtype)
    b1 = params["b1"].reshape(H1, 1).astype(compute_dtype)
    wout = params["Wout"].reshape(1, H1).astype(compute_dtype)

    # ---- activations: transpose each chunk to (F_i, Bp) so the batch sits on
    # the lane dim; cast once; pad lanes to the tile multiple.  No [B, F]
    # concatenated slab is ever written to HBM.
    def prep(x):
        xt = jnp.transpose(x).astype(compute_dtype)
        if Bp != B:
            xt = jnp.pad(xt, ((0, 0), (0, Bp - B)))
        return xt

    x1t, x2t, x3t = prep(x1), prep(x2), prep(x3)

    binary = (ytype == "Binary")
    kernel = functools.partial(ge_net_kernel, binary=binary)

    itemsize = jnp.dtype(compute_dtype).itemsize
    weight_elems = H0 * (F + 1) + H1 * (H0 + 1) + H1
    cost = pl.CostEstimate(
        flops=2 * Bp * (F * H0 + H0 + H0 * H1 + H1 + H1),
        transcendentals=Bp if binary else 0,
        bytes_accessed=Bp * F * itemsize + Bp * 4 + weight_elems * itemsize,
    )

    # Deeper buffering on the streamed x tiles only pays once there are
    # enough grid steps; weights/biases keep constant index_maps (resident).
    x_kwargs = dict(pipeline_mode=pl.Buffered(3)) if num_steps >= 4 else {}

    def x_spec(rows):
        return pl.BlockSpec((rows, tb), lambda i: (0, i), **x_kwargs)

    def const_spec(shape):
        return pl.BlockSpec(shape, lambda i: (0, 0))

    out = pl.pallas_call(
        kernel,
        out_shape=jax.ShapeDtypeStruct((1, Bp), jnp.float32),
        grid=(num_steps,),
        in_specs=[
            x_spec(in_nodes),                 # x1^T tile (streamed)
            x_spec(inter_nodes),              # x2^T tile
            x_spec(clin_nodes),               # x3^T tile
            const_spec((H0, in_nodes)),       # W0 chunk A (scales folded)
            const_spec((H0, inter_nodes)),    # W0 chunk B (scales folded)
            const_spec((H0, clin_nodes)),     # W0 chunk C
            const_spec((H0, 1)),              # b0 column
            const_spec((H1, H0)),             # W1
            const_spec((H1, 1)),              # b1 column
            const_spec((1, H1)),              # Wout row
        ],
        out_specs=pl.BlockSpec((1, tb), lambda i: (0, i)),   # lane-dense row
        compiler_params=pltpu.CompilerParams(
            dimension_semantics=("parallel",)),
        cost_estimate=cost,
    )(x1t, x2t, x3t, w0a, w0b, w0c, b0, w1, b1, wout)

    return out[:, :B].T   # back to the module's (B, 1) column


def init_params(key, in_nodes, inter_nodes, clin_nodes, hidden):
    """Deterministic synthetic init mimicking the PyTorch module (issnp=False)."""
    ks = jax.random.split(key, 7)
    total_in = in_nodes + inter_nodes + clin_nodes
    h0, h1 = hidden

    def lin_init(kw, kb, fan_in, fan_out):
        bound = 1.0 / jnp.sqrt(fan_in)
        W = jax.random.uniform(kw, (fan_out, fan_in), jnp.float32, -bound, bound)
        b = jax.random.uniform(kb, (fan_out,), jnp.float32, -bound, bound)
        return W, b

    s1 = jax.random.uniform(ks[0], (in_nodes,), jnp.float32, 0.0, 1.0)
    s2 = jax.random.uniform(ks[1], (inter_nodes,), jnp.float32, 0.0, 1.0)
    W0, b0 = lin_init(ks[2], ks[3], total_in, h0)
    W1, b1 = lin_init(ks[4], ks[5], h0, h1)
    Wout = jax.random.uniform(ks[6], (1, h1), jnp.float32, -0.001, 0.001)
    return dict(s1=s1, s2=s2, W0=W0, b0=b0, W1=W1, b1=b1, Wout=Wout)


def reference_forward(x1, x2, x3, p, *, ytype="Binary"):
    x = jnp.concatenate([x1 * p["s1"], x2 * p["s2"], x3], axis=1)
    h = jax.nn.relu(x @ p["W0"].T + p["b0"])
    h = jax.nn.relu(h @ p["W1"].T + p["b1"])
    out = h @ p["Wout"].T
    return jax.nn.sigmoid(out) if ytype == "Binary" else out


if __name__ == "__main__":
    # In_Nodes=16, Interaction_Nodes=32, Clinical_Nodes=8,
    # num_hidden_layers=2, nodes_hidden_layer=[32, 16], ytype='Binary',
    # issnp=False, batch=8.
    B, IN, INTER, CLIN = 8, 16, 32, 8
    hidden = (32, 16)

    key = jax.random.PRNGKey(0)
    k_x1, k_x2, k_x3, k_p = jax.random.split(key, 4)
    x1 = jax.random.normal(k_x1, (B, IN), jnp.float32)
    x2 = jax.random.normal(k_x2, (B, INTER), jnp.float32)
    x3 = jax.random.normal(k_x3, (B, CLIN), jnp.float32)
    params = init_params(k_p, IN, INTER, CLIN, hidden)

    ref = reference_forward(x1, x2, x3, params, ytype="Binary")

    # f32 compute path: closely matches the reference math.
    out_f32 = jax.block_until_ready(
        ge_net_forward(x1, x2, x3, params, ytype="Binary",
                       compute_dtype=jnp.float32))
    assert out_f32.shape == (B, 1)
    assert jnp.allclose(out_f32, ref, atol=1e-4, rtol=1e-4), "f32 mismatch"

    # bf16 MXU-operand path (default): halves HBM traffic; looser tolerance.
    out_bf16 = jax.block_until_ready(
        ge_net_forward(x1, x2, x3, params, ytype="Binary"))
    assert out_bf16.shape == (B, 1)
    assert jnp.allclose(out_bf16, ref, atol=2e-2, rtol=2e-2), "bf16 mismatch"

    # Non-binary head (no sigmoid) on a batch big enough for a multi-step
    # grid: exercises tiling, lane padding and the parallel axis.
    B2 = 300
    kk = jax.random.split(jax.random.PRNGKey(1), 3)
    y1 = jax.random.normal(kk[0], (B2, IN), jnp.float32)
    y2 = jax.random.normal(kk[1], (B2, INTER), jnp.float32)
    y3 = jax.random.normal(kk[2], (B2, CLIN), jnp.float32)
    ref2 = reference_forward(y1, y2, y3, params, ytype="Survival")
    out2 = jax.block_until_ready(
        ge_net_forward(y1, y2, y3, params, ytype="Survival",
                       compute_dtype=jnp.float32))
    assert out2.shape == (B2, 1)
    assert jnp.allclose(out2, ref2, atol=1e-4, rtol=1e-3), "survival mismatch"

    print("KERNEL_OK")
</pallas_src>

<mosaic_0001>
module attributes {stable_mosaic.version = 11 : i64} {
  func.func @ge_net_kernel(%arg0: i32, %arg1: memref<16x128xf32, #tpu.memory_space<vmem>>, %arg2: memref<32x128xf32, #tpu.memory_space<vmem>>, %arg3: memref<8x128xf32, #tpu.memory_space<vmem>>, %arg4: memref<32x16xf32, #tpu.memory_space<vmem>>, %arg5: memref<32x32xf32, #tpu.memory_space<vmem>>, %arg6: memref<32x8xf32, #tpu.memory_space<vmem>>, %arg7: memref<32x1xf32, #tpu.memory_space<vmem>>, %arg8: memref<16x32xf32, #tpu.memory_space<vmem>>, %arg9: memref<16x1xf32, #tpu.memory_space<vmem>>, %arg10: memref<1x16xf32, #tpu.memory_space<vmem>>, %arg11: memref<1x128xf32, #tpu.memory_space<vmem>>) attributes {dimension_semantics = [#tpu.dimension_semantics<parallel>], iteration_bounds = array<i64: 1>, scalar_prefetch = 0 : i64, scratch_operands = 0 : i64, tpu.core_type = #tpu.core_type<tc>, window_params = [{transform_indices = @transform_0, window_bounds = array<i64: 16, 128>}, {transform_indices = @transform_1, window_bounds = array<i64: 32, 128>}, {transform_indices = @transform_2, window_bounds = array<i64: 8, 128>}, {pipeline_mode = #tpu.pipeline_mode<synchronous>, transform_indices = @transform_3, window_bounds = array<i64: 32, 16>}, {pipeline_mode = #tpu.pipeline_mode<synchronous>, transform_indices = @transform_4, window_bounds = array<i64: 32, 32>}, {pipeline_mode = #tpu.pipeline_mode<synchronous>, transform_indices = @transform_5, window_bounds = array<i64: 32, 8>}, {pipeline_mode = #tpu.pipeline_mode<synchronous>, transform_indices = @transform_6, window_bounds = array<i64: 32, 1>}, {pipeline_mode = #tpu.pipeline_mode<synchronous>, transform_indices = @transform_7, window_bounds = array<i64: 16, 32>}, {pipeline_mode = #tpu.pipeline_mode<synchronous>, transform_indices = @transform_8, window_bounds = array<i64: 16, 1>}, {pipeline_mode = #tpu.pipeline_mode<synchronous>, transform_indices = @transform_9, window_bounds = array<i64: 1, 16>}, {transform_indices = @transform_10, window_bounds = array<i64: 1, 128>}]} {
    %cst = arith.constant 1.000000e+00 : f32
    %0 = vector.broadcast %cst : f32 to vector<1x128xf32>
    %c0 = arith.constant 0 : index
    %c0_0 = arith.constant 0 : index
    %1 = vector.load %arg4[%c0, %c0_0] : memref<32x16xf32, #tpu.memory_space<vmem>>, vector<32x16xf32>
    %c0_1 = arith.constant 0 : index
    %c0_2 = arith.constant 0 : index
    %2 = vector.load %arg1[%c0_1, %c0_2] : memref<16x128xf32, #tpu.memory_space<vmem>>, vector<16x128xf32>
    %cst_3 = arith.constant dense<0.000000e+00> : vector<32x128xf32>
    %3 = tpu.matmul %1, %2, %cst_3 {dimension_numbers = #tpu.dot_dimension_numbers<[1], [0], [0], [1], [0, 0, 1, 1], [], []>} : vector<32x16xf32>, vector<16x128xf32>, vector<32x128xf32> -> vector<32x128xf32>
    %c0_4 = arith.constant 0 : index
    %c0_5 = arith.constant 0 : index
    %4 = vector.load %arg5[%c0_4, %c0_5] : memref<32x32xf32, #tpu.memory_space<vmem>>, vector<32x32xf32>
    %c0_6 = arith.constant 0 : index
    %c0_7 = arith.constant 0 : index
    %5 = vector.load %arg2[%c0_6, %c0_7] : memref<32x128xf32, #tpu.memory_space<vmem>>, vector<32x128xf32>
    %cst_8 = arith.constant dense<0.000000e+00> : vector<32x128xf32>
    %6 = tpu.matmul %4, %5, %cst_8 {dimension_numbers = #tpu.dot_dimension_numbers<[1], [0], [0], [1], [0, 0, 1, 1], [], []>} : vector<32x32xf32>, vector<32x128xf32>, vector<32x128xf32> -> vector<32x128xf32>
    %7 = arith.addf %3, %6 : vector<32x128xf32>
    %c0_9 = arith.constant 0 : index
    %c0_10 = arith.constant 0 : index
    %8 = vector.load %arg6[%c0_9, %c0_10] : memref<32x8xf32, #tpu.memory_space<vmem>>, vector<32x8xf32>
    %c0_11 = arith.constant 0 : index
    %c0_12 = arith.constant 0 : index
    %9 = vector.load %arg3[%c0_11, %c0_12] : memref<8x128xf32, #tpu.memory_space<vmem>>, vector<8x128xf32>
    %cst_13 = arith.constant dense<0.000000e+00> : vector<32x128xf32>
    %10 = tpu.matmul %8, %9, %cst_13 {dimension_numbers = #tpu.dot_dimension_numbers<[1], [0], [0], [1], [0, 0, 1, 1], [], []>} : vector<32x8xf32>, vector<8x128xf32>, vector<32x128xf32> -> vector<32x128xf32>
    %11 = arith.addf %7, %10 : vector<32x128xf32>
    %c0_14 = arith.constant 0 : index
    %c0_15 = arith.constant 0 : index
    %12 = vector.load %arg7[%c0_14, %c0_15] : memref<32x1xf32, #tpu.memory_space<vmem>>, vector<32x1xf32>
    %cst_16 = arith.constant dense<0.000000e+00> : vector<32x128xf32>
    %13 = tpu.matmul %12, %0, %cst_16 {dimension_numbers = #tpu.dot_dimension_numbers<[1], [0], [0], [1], [0, 0, 1, 1], [], []>} : vector<32x1xf32>, vector<1x128xf32>, vector<32x128xf32> -> vector<32x128xf32>
    %14 = arith.addf %11, %13 : vector<32x128xf32>
    %cst_17 = arith.constant 0.000000e+00 : f32
    %15 = vector.broadcast %cst_17 : f32 to vector<32x128xf32>
    %16 = arith.maximumf %14, %15 : vector<32x128xf32>
    %c0_18 = arith.constant 0 : index
    %c0_19 = arith.constant 0 : index
    %17 = vector.load %arg8[%c0_18, %c0_19] : memref<16x32xf32, #tpu.memory_space<vmem>>, vector<16x32xf32>
    %cst_20 = arith.constant dense<0.000000e+00> : vector<16x128xf32>
    %18 = tpu.matmul %17, %16, %cst_20 {dimension_numbers = #tpu.dot_dimension_numbers<[1], [0], [0], [1], [0, 0, 1, 1], [], []>} : vector<16x32xf32>, vector<32x128xf32>, vector<16x128xf32> -> vector<16x128xf32>
    %c0_21 = arith.constant 0 : index
    %c0_22 = arith.constant 0 : index
    %19 = vector.load %arg9[%c0_21, %c0_22] : memref<16x1xf32, #tpu.memory_space<vmem>>, vector<16x1xf32>
    %cst_23 = arith.constant dense<0.000000e+00> : vector<16x128xf32>
    %20 = tpu.matmul %19, %0, %cst_23 {dimension_numbers = #tpu.dot_dimension_numbers<[1], [0], [0], [1], [0, 0, 1, 1], [], []>} : vector<16x1xf32>, vector<1x128xf32>, vector<16x128xf32> -> vector<16x128xf32>
    %21 = arith.addf %18, %20 : vector<16x128xf32>
    %cst_24 = arith.constant 0.000000e+00 : f32
    %22 = vector.broadcast %cst_24 : f32 to vector<16x128xf32>
    %23 = arith.maximumf %21, %22 : vector<16x128xf32>
    %c0_25 = arith.constant 0 : index
    %c0_26 = arith.constant 0 : index
    %24 = vector.load %arg10[%c0_25, %c0_26] : memref<1x16xf32, #tpu.memory_space<vmem>>, vector<1x16xf32>
    %cst_27 = arith.constant dense<0.000000e+00> : vector<1x128xf32>
    %25 = tpu.matmul %24, %23, %cst_27 {dimension_numbers = #tpu.dot_dimension_numbers<[1], [0], [0], [1], [0, 0, 1, 1], [], []>} : vector<1x16xf32>, vector<16x128xf32>, vector<1x128xf32> -> vector<1x128xf32>
    %26 = arith.negf %25 : vector<1x128xf32>
    %27 = math.exp %26 : vector<1x128xf32>
    %cst_28 = arith.constant 1.000000e+00 : f32
    %28 = vector.broadcast %cst_28 : f32 to vector<1x128xf32>
    %29 = arith.addf %28, %27 : vector<1x128xf32>
    %30 = arith.divf %28, %29 : vector<1x128xf32>
    %c0_29 = arith.constant 0 : index
    %c0_30 = arith.constant 0 : index
    %31 = vector.load %arg11[%c0_29, %c0_30] : memref<1x128xf32, #tpu.memory_space<vmem>>, vector<1x128xf32>
    tpu.vector_store %arg11[%c0_29, %c0_30], %30 {strides = array<i32>} : memref<1x128xf32, #tpu.memory_space<vmem>>, vector<1x128xf32>,
    return
  }
  func.func @transform_0(%arg0: i32) -> (i32, i32) {
    %c0_i32 = arith.constant 0 : i32
    %c0_i32_0 = arith.constant 0 : i32
    return %c0_i32, %arg0 : i32, i32
  }
  func.func @transform_1(%arg0: i32) -> (i32, i32) {
    %c0_i32 = arith.constant 0 : i32
    %c0_i32_0 = arith.constant 0 : i32
    return %c0_i32, %arg0 : i32, i32
  }
  func.func @transform_2(%arg0: i32) -> (i32, i32) {
    %c0_i32 = arith.constant 0 : i32
    %c0_i32_0 = arith.constant 0 : i32
    return %c0_i32, %arg0 : i32, i32
  }
  func.func @transform_3(%arg0: i32) -> (i32, i32) {
    %c0_i32 = arith.constant 0 : i32
    %c0_i32_0 = arith.constant 0 : i32
    %c0_i32_1 = arith.constant 0 : i32
    return %c0_i32, %c0_i32_0 : i32, i32
  }
  func.func @transform_4(%arg0: i32) -> (i32, i32) {
    %c0_i32 = arith.constant 0 : i32
    %c0_i32_0 = arith.constant 0 : i32
    %c0_i32_1 = arith.constant 0 : i32
    return %c0_i32, %c0_i32_0 : i32, i32
  }
  func.func @transform_5(%arg0: i32) -> (i32, i32) {
    %c0_i32 = arith.constant 0 : i32
    %c0_i32_0 = arith.constant 0 : i32
    %c0_i32_1 = arith.constant 0 : i32
    return %c0_i32, %c0_i32_0 : i32, i32
  }
  func.func @transform_6(%arg0: i32) -> (i32, i32) {
    %c0_i32 = arith.constant 0 : i32
    %c0_i32_0 = arith.constant 0 : i32
    %c0_i32_1 = arith.constant 0 : i32
    return %c0_i32, %c0_i32_0 : i32, i32
  }
  func.func @transform_7(%arg0: i32) -> (i32, i32) {
    %c0_i32 = arith.constant 0 : i32
    %c0_i32_0 = arith.constant 0 : i32
    %c0_i32_1 = arith.constant 0 : i32
    return %c0_i32, %c0_i32_0 : i32, i32
  }
  func.func @transform_8(%arg0: i32) -> (i32, i32) {
    %c0_i32 = arith.constant 0 : i32
    %c0_i32_0 = arith.constant 0 : i32
    %c0_i32_1 = arith.constant 0 : i32
    return %c0_i32, %c0_i32_0 : i32, i32
  }
  func.func @transform_9(%arg0: i32) -> (i32, i32) {
    %c0_i32 = arith.constant 0 : i32
    %c0_i32_0 = arith.constant 0 : i32
    %c0_i32_1 = arith.constant 0 : i32
    return %c0_i32, %c0_i32_0 : i32, i32
  }
  func.func @transform_10(%arg0: i32) -> (i32, i32) {
    %c0_i32 = arith.constant 0 : i32
    %c0_i32_0 = arith.constant 0 : i32
    return %c0_i32, %arg0 : i32, i32
  }
}

</mosaic_0001>

<llo_original>
// kernel: tpu_custom_call.1
$region0: #{tpu_custom_call.1}
  #allocation0 [shape = 'u32[]', space=smem, size = 0x4, offset = 0x4, fixed_abs, tag = 'smem constant byte address 0x4 - core index']
  #allocation1 [shape = 'u32[144,128]{1,0:T(1,128)}', space=vmem, size = 0x12000, scoped, tag = 'internal scratch']
  %s0 = inlined_call_operand.vmem [shape: f32[16,128], index: 0, kind: input, shape index: {}]
  %s1 = inlined_call_operand.vmem [shape: f32[32,128], index: 1, kind: input, shape index: {}]
  %s2 = inlined_call_operand.vmem [shape: f32[8,128], index: 2, kind: input, shape index: {}]
  %s3 = inlined_call_operand.vmem [shape: f32[32,16], index: 3, kind: input, shape index: {}]
  %s4 = inlined_call_operand.vmem [shape: f32[32,32], index: 4, kind: input, shape index: {}]
  %s5 = inlined_call_operand.vmem [shape: f32[32,8], index: 5, kind: input, shape index: {}]
  %s6 = inlined_call_operand.vmem [shape: f32[32,1], index: 6, kind: input, shape index: {}]
  %s7 = inlined_call_operand.vmem [shape: f32[16,32], index: 7, kind: input, shape index: {}]
  %s8 = inlined_call_operand.vmem [shape: f32[16,1], index: 8, kind: input, shape index: {}]
  %s9 = inlined_call_operand.vmem [shape: f32[1,16], index: 9, kind: input, shape index: {}]
  %s10 = inlined_call_operand.hbm [shape: f32[1,128], index: 10, kind: output, shape index: {}]
  %s11 = sld [smem:[#allocation0]]
  $region50: #{tpu_custom_call.1} parent=0
    _
  %s13 = ssub.s32 1, %s11
  %s14 = scalar_select 0, %s13, %s11
  $region1: #{tpu_custom_call.1} parent=0
    #allocation2 [shape = 'u8[512]{0}', space=vmem, size = 0x400, scoped, tag = 'output window, operand 0, single buffered']
    #allocation3 [shape = 's32[1]{0}', space=sflag, size = 0x4, scoped, tag = 'scoped memory for tpu_custom_call.1']
    %15 = vsyncpa [#allocation3], 0
    // Predicated region
    $region2: #{tpu_custom_call.1} parent=1 // pred_check
      _
    $region3: #{tpu_custom_call.1} parent=1 // pred_check_branch
      %17 = sbr.rel (0) target = $region5
    $region4: #{tpu_custom_call.1} parent=1 // pred_region
      _
    $region5: #{tpu_custom_call.1} parent=1 // pred_fallthru
      _
    // Predicated region
    $region6: #{tpu_custom_call.1} parent=1 // pred_check
      _
    $region7: #{tpu_custom_call.1} parent=1 // pred_check_branch
      %19 = sbr.rel (0) target = $region9
    $region8: #{tpu_custom_call.1} parent=1 // pred_region
      _
    $region9: #{tpu_custom_call.1} parent=1 // pred_fallthru
      _
    // Predicated region
    $region10: #{tpu_custom_call.1} parent=1 // pred_check
      _
    $region11: #{tpu_custom_call.1} parent=1 // pred_check_branch
      %21 = sbr.rel (0) target = $region13
    $region12: #{tpu_custom_call.1} parent=1 // pred_region
      _
    $region13: #{tpu_custom_call.1} parent=1 // pred_fallthru
      _
    // Predicated region
    $region14: #{tpu_custom_call.1} parent=1 // pred_check
      _
    $region15: #{tpu_custom_call.1} parent=1 // pred_check_branch
      %23 = sbr.rel (0) target = $region17
    $region16: #{tpu_custom_call.1} parent=1 // pred_region
      _
    $region17: #{tpu_custom_call.1} parent=1 // pred_fallthru
      _
    // Predicated region
    $region18: #{tpu_custom_call.1} parent=1 // pred_check
      _
    $region19: #{tpu_custom_call.1} parent=1 // pred_check_branch
      %25 = sbr.rel (0) target = $region21
    $region20: #{tpu_custom_call.1} parent=1 // pred_region
      _
    $region21: #{tpu_custom_call.1} parent=1 // pred_fallthru
      _
    // Predicated region
    $region22: #{tpu_custom_call.1} parent=1 // pred_check
      _
    $region23: #{tpu_custom_call.1} parent=1 // pred_check_branch
      %27 = sbr.rel (0) target = $region25
    $region24: #{tpu_custom_call.1} parent=1 // pred_region
      _
    $region25: #{tpu_custom_call.1} parent=1 // pred_fallthru
      _
    // Predicated region
    $region26: #{tpu_custom_call.1} parent=1 // pred_check
      _
    $region27: #{tpu_custom_call.1} parent=1 // pred_check_branch
      %29 = sbr.rel (0) target = $region29
    $region28: #{tpu_custom_call.1} parent=1 // pred_region
      _
    $region29: #{tpu_custom_call.1} parent=1 // pred_fallthru
      _
    // Predicated region
    $region30: #{tpu_custom_call.1} parent=1 // pred_check
      _
    $region31: #{tpu_custom_call.1} parent=1 // pred_check_branch
      %31 = sbr.rel (0) target = $region33
    $region32: #{tpu_custom_call.1} parent=1 // pred_region
      _
    $region33: #{tpu_custom_call.1} parent=1 // pred_fallthru
      _
    // Predicated region
    $region34: #{tpu_custom_call.1} parent=1 // pred_check
      _
    $region35: #{tpu_custom_call.1} parent=1 // pred_check_branch
      %33 = sbr.rel (0) target = $region37
    $region36: #{tpu_custom_call.1} parent=1 // pred_region
      _
    $region37: #{tpu_custom_call.1} parent=1 // pred_fallthru
      _
    // Predicated region
    $region38: #{tpu_custom_call.1} parent=1 // pred_check
      _
    $region39: #{tpu_custom_call.1} parent=1 // pred_check_branch
      %35 = sbr.rel (0) target = $region41
    $region40: #{tpu_custom_call.1} parent=1 // pred_region
      _
    $region41: #{tpu_custom_call.1} parent=1 // pred_fallthru
      _
    %v36 = vld [vmem:[%s3] sm:$0xff]
    %v37 = vld [vmem:[%s3 + $0x8] sm:$0xff]
    %v38 = vld [vmem:[%s3 + $0x10] sm:$0xff]
    %v39 = vld [vmem:[%s3 + $0x18] sm:$0xff]
    %v40 = vld [vmem:[%s0] sm:$0xff]
    %v41 = vld [vmem:[%s0 + $0x8] sm:$0xff]
    %v42 = vld [vmem:[%s4] sm:$0xff]
    %v43 = vld [vmem:[%s4 + $0x8] sm:$0xff]
    %v44 = vld [vmem:[%s4 + $0x10] sm:$0xff]
    %v45 = vld [vmem:[%s4 + $0x18] sm:$0xff]
    %v46 = vld [vmem:[%s1] sm:$0xff]
    %v47 = vld [vmem:[%s1 + $0x8] sm:$0xff]
    %v48 = vld [vmem:[%s1 + $0x10] sm:$0xff]
    %v49 = vld [vmem:[%s1 + $0x18] sm:$0xff]
    %vm50 = vcmask 261120
    %v52 = vsel %vm50, %v42, 0
    %v55 = vsel %vm50, %v43, 0
    %v58 = vsel %vm50, %v44, 0
    %v61 = vsel %vm50, %v45, 0
    %63 = vmatprep.subr.mxu0 0.0
    %64 = vmatpush1.msra.mxu0 %v46
    %65 = vmatprep.subr.mxu0 0.0
    %66 = vmatpush1.msra.mxu0 %v47
    %67 = vmatprep.subr.mxu0 0.0
    %68 = vmatpush1.msra.mxu0 %v48
    %69 = vmatprep.subr.mxu0 0.0
    %70 = vmatpush1.msra.mxu0 %v49
    %71 = vmatprep.subr.mxu0 0.0
    %72 = vmatpush1.msra.mxu0 0.0
    %73 = vmatprep.subr.mxu0 0.0
    %74 = vmatpush1.msra.mxu0 0.0
    %75 = vmatprep.subr.mxu0 0.0
    %76 = vmatpush1.msra.mxu0 0.0
    %77 = vmatprep.subr.mxu0 0.0
    %78 = vmatpush1.msra.mxu0 0.0
    %79 = vmatprep.subr.mxu0 0.0
    %80 = vmatpush1.msra.mxu0 0.0
    %81 = vmatprep.subr.mxu0 0.0
    %82 = vmatpush1.msra.mxu0 0.0
    %83 = vmatprep.subr.mxu0 0.0
    %84 = vmatpush1.msra.mxu0 0.0
    %85 = vmatprep.subr.mxu0 0.0
    %86 = vmatpush1.msra.mxu0 0.0
    %87 = vmatprep.subr.mxu0 0.0
    %88 = vmatpush1.msra.mxu0 0.0
    %89 = vmatprep.subr.mxu0 0.0
    %90 = vmatpush1.msra.mxu0 0.0
    %91 = vmatprep.subr.mxu0 0.0
    %92 = vmatpush1.msra.mxu0 0.0
    %93 = vmatprep.subr.mxu0 0.0
    %94 = vmatpush1.msra.mxu0 0.0
    %95 = vmatprep.subr.mxu0 0.0
    %96 = vmatpush1.msra.mxu0 0.0
    %97 = vmatprep.subr.mxu0 0.0
    %98 = vmatpush1.msra.mxu0 0.0
    %99 = vmatprep.subr.mxu0 0.0
    %100 = vmatpush1.msra.mxu0 0.0
    %101 = vmatprep.subr.mxu0 0.0
    %102 = vmatpush1.msra.mxu0 0.0
    %103 = vmatprep.subr.mxu0 0.0
    %104 = vmatpush1.msra.mxu0 0.0
    %105 = vmatprep.subr.mxu0 0.0
    %106 = vmatpush1.msra.mxu0 0.0
    %107 = vmatprep.subr.mxu0 0.0
    %108 = vmatpush1.msra.mxu0 0.0
    %109 = vmatprep.subr.mxu0 0.0
    %110 = vmatpush1.msra.mxu0 0.0
    %111 = vmatprep.subr.mxu0 0.0
    %112 = vmatpush1.msra.mxu0 0.0
    %113 = vmatprep.subr.mxu0 0.0
    %114 = vmatpush1.msra.mxu0 0.0
    %115 = vmatprep.subr.mxu0 0.0
    %116 = vmatpush1.msra.mxu0 0.0
    %117 = vmatprep.subr.mxu0 0.0
    %118 = vmatpush1.msra.mxu0 0.0
    %119 = vmatprep.subr.mxu0 0.0
    %120 = vmatpush1.msra.mxu0 0.0
    %121 = vmatprep.subr.mxu0 0.0
    %122 = vmatpush1.msra.mxu0 0.0
    %123 = vmatprep.subr.mxu0 0.0
    %124 = vmatpush1.msra.mxu0 0.0
    %125 = vmatprep.subr.mxu0 0.0
    %126 = vmatpush1.msra.mxu0 0.0
    %127 = vmatprep.mubr.f32.mxu0 0.0
    %128 = vmatmul.mubr.f32.gmra.mrb[0].mxu0 %v52
    %v129 = vpop.f32.mrb[0].mxu0
    %v130 = vadd.f32 0.0, %v129
    %v131 = vpop.f32.mrb[0].mxu0
    %132 = vmatprep.mubr.f32.mxu0 0.0
    %133 = vmatmul.mubr.f32.gmra.mrb[0].mxu0 %v55
    %v134 = vpop.f32.mrb[0].mxu0
    %v135 = vadd.f32 0.0, %v134
    %v136 = vpop.f32.mrb[0].mxu0
    %137 = vmatprep.mubr.f32.mxu0 0.0
    %138 = vmatmul.mubr.f32.gmra.mrb[0].mxu0 %v58
    %v139 = vpop.f32.mrb[0].mxu0
    %v140 = vadd.f32 0.0, %v139
    %v141 = vpop.f32.mrb[0].mxu0
    %142 = vmatprep.mubr.f32.mxu0 0.0
    %143 = vmatmul.mubr.f32.gmra.mrb[0].mxu0 %v61
    %v144 = vpop.f32.mrb[0].mxu0
    %v145 = vadd.f32 0.0, %v144
    %v146 = vpop.f32.mrb[0].mxu0
    %147 = vdwg.mxu0
    %vm148 = vcmask 130048
    %v150 = vsel %vm148, %v36, 0
    %v153 = vsel %vm148, %v37, 0
    %v156 = vsel %vm148, %v38, 0
    %v159 = vsel %vm148, %v39, 0
    %161 = vmatprep.subr.mxu0 0.0
    %162 = vmatpush1.msra.mxu0 %v40
    %163 = vmatprep.subr.mxu0 0.0
    %164 = vmatpush1.msra.mxu0 %v41
    %165 = vmatprep.subr.mxu0 0.0
    %166 = vmatpush1.msra.mxu0 0.0
    %167 = vmatprep.subr.mxu0 0.0
    %168 = vmatpush1.msra.mxu0 0.0
    %169 = vmatprep.subr.mxu0 0.0
    %170 = vmatpush1.msra.mxu0 0.0
    %171 = vmatprep.subr.mxu0 0.0
    %172 = vmatpush1.msra.mxu0 0.0
    %173 = vmatprep.subr.mxu0 0.0
    %174 = vmatpush1.msra.mxu0 0.0
    %175 = vmatprep.subr.mxu0 0.0
    %176 = vmatpush1.msra.mxu0 0.0
    %177 = vmatprep.subr.mxu0 0.0
    %178 = vmatpush1.msra.mxu0 0.0
    %179 = vmatprep.subr.mxu0 0.0
    %180 = vmatpush1.msra.mxu0 0.0
    %181 = vmatprep.subr.mxu0 0.0
    %182 = vmatpush1.msra.mxu0 0.0
    %183 = vmatprep.subr.mxu0 0.0
    %184 = vmatpush1.msra.mxu0 0.0
    %185 = vmatprep.subr.mxu0 0.0
    %186 = vmatpush1.msra.mxu0 0.0
    %187 = vmatprep.subr.mxu0 0.0
    %188 = vmatpush1.msra.mxu0 0.0
    %189 = vmatprep.subr.mxu0 0.0
    %190 = vmatpush1.msra.mxu0 0.0
    %191 = vmatprep.subr.mxu0 0.0
    %192 = vmatpush1.msra.mxu0 0.0
    %193 = vmatprep.subr.mxu0 0.0
    %194 = vmatpush1.msra.mxu0 0.0
    %195 = vmatprep.subr.mxu0 0.0
    %196 = vmatpush1.msra.mxu0 0.0
    %197 = vmatprep.subr.mxu0 0.0
    %198 = vmatpush1.msra.mxu0 0.0
    %199 = vmatprep.subr.mxu0 0.0
    %200 = vmatpush1.msra.mxu0 0.0
    %201 = vmatprep.subr.mxu0 0.0
    %202 = vmatpush1.msra.mxu0 0.0
    %203 = vmatprep.subr.mxu0 0.0
    %204 = vmatpush1.msra.mxu0 0.0
    %205 = vmatprep.subr.mxu0 0.0
    %206 = vmatpush1.msra.mxu0 0.0
    %207 = vmatprep.subr.mxu0 0.0
    %208 = vmatpush1.msra.mxu0 0.0
    %209 = vmatprep.subr.mxu0 0.0
    %210 = vmatpush1.msra.mxu0 0.0
    %211 = vmatprep.subr.mxu0 0.0
    %212 = vmatpush1.msra.mxu0 0.0
    %213 = vmatprep.subr.mxu0 0.0
    %214 = vmatpush1.msra.mxu0 0.0
    %215 = vmatprep.subr.mxu0 0.0
    %216 = vmatpush1.msra.mxu0 0.0
    %217 = vmatprep.subr.mxu0 0.0
    %218 = vmatpush1.msra.mxu0 0.0
    %219 = vmatprep.subr.mxu0 0.0
    %220 = vmatpush1.msra.mxu0 0.0
    %221 = vmatprep.subr.mxu0 0.0
    %222 = vmatpush1.msra.mxu0 0.0
    %223 = vmatprep.subr.mxu0 0.0
    %224 = vmatpush1.msra.mxu0 0.0
    %225 = vmatprep.mubr.f32.mxu0 0.0
    %226 = vmatmul.mubr.f32.gmra.mrb[0].mxu0 %v150
    %v227 = vpop.f32.mrb[0].mxu0
    %v228 = vadd.f32 %v130, %v227
    %v229 = vpop.f32.mrb[0].mxu0
    %230 = vmatprep.mubr.f32.mxu0 0.0
    %231 = vmatmul.mubr.f32.gmra.mrb[0].mxu0 %v153
    %v232 = vpop.f32.mrb[0].mxu0
    %v233 = vadd.f32 %v135, %v232
    %v234 = vpop.f32.mrb[0].mxu0
    %235 = vmatprep.mubr.f32.mxu0 0.0
    %236 = vmatmul.mubr.f32.gmra.mrb[0].mxu0 %v156
    %v237 = vpop.f32.mrb[0].mxu0
    %v238 = vadd.f32 %v140, %v237
    %v239 = vpop.f32.mrb[0].mxu0
    %240 = vmatprep.mubr.f32.mxu0 0.0
    %241 = vmatmul.mubr.f32.gmra.mrb[0].mxu0 %v159
    %v242 = vpop.f32.mrb[0].mxu0
    %v243 = vadd.f32 %v145, %v242
    %v244 = vpop.f32.mrb[0].mxu0
    %245 = vdwg.mxu0
    %v246 = vld [vmem:[%s5] sm:$0xff]
    %v247 = vld [vmem:[%s5 + $0x8] sm:$0xff]
    %v248 = vld [vmem:[%s5 + $0x10] sm:$0xff]
    %v249 = vld [vmem:[%s5 + $0x18] sm:$0xff]
    %v250 = vld [vmem:[%s2] sm:$0xff]
    %vm251 = vcmask 64512
    %v253 = vsel %vm251, %v246, 0
    %v256 = vsel %vm251, %v247, 0
    %v259 = vsel %vm251, %v248, 0
    %v262 = vsel %vm251, %v249, 0
    %264 = vmatprep.subr.mxu0 0.0
    %265 = vmatpush1.msra.mxu0 %v250
    %266 = vmatprep.subr.mxu0 0.0
    %267 = vmatpush1.msra.mxu0 0.0
    %268 = vmatprep.subr.mxu0 0.0
    %269 = vmatpush1.msra.mxu0 0.0
    %270 = vmatprep.subr.mxu0 0.0
    %271 = vmatpush1.msra.mxu0 0.0
    %272 = vmatprep.subr.mxu0 0.0
    %273 = vmatpush1.msra.mxu0 0.0
    %274 = vmatprep.subr.mxu0 0.0
    %275 = vmatpush1.msra.mxu0 0.0
    %276 = vmatprep.subr.mxu0 0.0
    %277 = vmatpush1.msra.mxu0 0.0
    %278 = vmatprep.subr.mxu0 0.0
    %279 = vmatpush1.msra.mxu0 0.0
    %280 = vmatprep.subr.mxu0 0.0
    %281 = vmatpush1.msra.mxu0 0.0
    %282 = vmatprep.subr.mxu0 0.0
    %283 = vmatpush1.msra.mxu0 0.0
    %284 = vmatprep.subr.mxu0 0.0
    %285 = vmatpush1.msra.mxu0 0.0
    %286 = vmatprep.subr.mxu0 0.0
    %287 = vmatpush1.msra.mxu0 0.0
    %288 = vmatprep.subr.mxu0 0.0
    %289 = vmatpush1.msra.mxu0 0.0
    %290 = vmatprep.subr.mxu0 0.0
    %291 = vmatpush1.msra.mxu0 0.0
    %292 = vmatprep.subr.mxu0 0.0
    %293 = vmatpush1.msra.mxu0 0.0
    %294 = vmatprep.subr.mxu0 0.0
    %295 = vmatpush1.msra.mxu0 0.0
    %296 = vmatprep.subr.mxu0 0.0
    %297 = vmatpush1.msra.mxu0 0.0
    %298 = vmatprep.subr.mxu0 0.0
    %299 = vmatpush1.msra.mxu0 0.0
    %300 = vmatprep.subr.mxu0 0.0
    %301 = vmatpush1.msra.mxu0 0.0
    %302 = vmatprep.subr.mxu0 0.0
    %303 = vmatpush1.msra.mxu0 0.0
    %304 = vmatprep.subr.mxu0 0.0
    %305 = vmatpush1.msra.mxu0 0.0
    %306 = vmatprep.subr.mxu0 0.0
    %307 = vmatpush1.msra.mxu0 0.0
    %308 = vmatprep.subr.mxu0 0.0
    %309 = vmatpush1.msra.mxu0 0.0
    %310 = vmatprep.subr.mxu0 0.0
    %311 = vmatpush1.msra.mxu0 0.0
    %312 = vmatprep.subr.mxu0 0.0
    %313 = vmatpush1.msra.mxu0 0.0
    %314 = vmatprep.subr.mxu0 0.0
    %315 = vmatpush1.msra.mxu0 0.0
    %316 = vmatprep.subr.mxu0 0.0
    %317 = vmatpush1.msra.mxu0 0.0
    %318 = vmatprep.subr.mxu0 0.0
    %319 = vmatpush1.msra.mxu0 0.0
    %320 = vmatprep.subr.mxu0 0.0
    %321 = vmatpush1.msra.mxu0 0.0
    %322 = vmatprep.subr.mxu0 0.0
    %323 = vmatpush1.msra.mxu0 0.0
    %324 = vmatprep.subr.mxu0 0.0
    %325 = vmatpush1.msra.mxu0 0.0
    %326 = vmatprep.subr.mxu0 0.0
    %327 = vmatpush1.msra.mxu0 0.0
    %328 = vmatprep.mubr.f32.mxu0 0.0
    %329 = vmatmul.mubr.f32.gmra.mrb[0].mxu0 %v253
    %v330 = vpop.f32.mrb[0].mxu0
    %v331 = vadd.f32 0.0, %v330
    %v332 = vpop.f32.mrb[0].mxu0
    %333 = vmatprep.mubr.f32.mxu0 0.0
    %334 = vmatmul.mubr.f32.gmra.mrb[0].mxu0 %v256
    %v335 = vpop.f32.mrb[0].mxu0
    %v336 = vadd.f32 0.0, %v335
    %v337 = vpop.f32.mrb[0].mxu0
    %338 = vmatprep.mubr.f32.mxu0 0.0
    %339 = vmatmul.mubr.f32.gmra.mrb[0].mxu0 %v259
    %v340 = vpop.f32.mrb[0].mxu0
    %v341 = vadd.f32 0.0, %v340
    %v342 = vpop.f32.mrb[0].mxu0
    %343 = vmatprep.mubr.f32.mxu0 0.0
    %344 = vmatmul.mubr.f32.gmra.mrb[0].mxu0 %v262
    %v345 = vpop.f32.mrb[0].mxu0
    %v346 = vadd.f32 0.0, %v345
    %v347 = vpop.f32.mrb[0].mxu0
    %348 = vdwg.mxu0
    %v349 = vadd.f32 %v228, %v331
    %v350 = vadd.f32 %v233, %v336
    %v351 = vadd.f32 %v238, %v341
    %v352 = vadd.f32 %v243, %v346
    %v353 = vld [vmem:[%s6] sm:$0xff]
    %v354 = vld [vmem:[%s6 + $0x8] sm:$0xff]
    %v355 = vld [vmem:[%s6 + $0x10] sm:$0xff]
    %v356 = vld [vmem:[%s6 + $0x18] sm:$0xff]
    %vm357 = vcmask 7168
    %v359 = vsel %vm357, %v353, 0
    %v362 = vsel %vm357, %v354, 0
    %v365 = vsel %vm357, %v355, 0
    %v368 = vsel %vm357, %v356, 0
    %vm370 = vcmask 1040384
    %v372 = vsel %vm370, 1.0, 0
    %374 = vmatprep.subr.mxu0 0.0
    %375 = vmatpush1.msra.mxu0 %v372
    %376 = vmatprep.subr.mxu0 0.0
    %377 = vmatpush1.msra.mxu0 0.0
    %378 = vmatprep.subr.mxu0 0.0
    %379 = vmatpush1.msra.mxu0 0.0
    %380 = vmatprep.subr.mxu0 0.0
    %381 = vmatpush1.msra.mxu0 0.0
    %382 = vmatprep.subr.mxu0 0.0
    %383 = vmatpush1.msra.mxu0 0.0
    %384 = vmatprep.subr.mxu0 0.0
    %385 = vmatpush1.msra.mxu0 0.0
    %386 = vmatprep.subr.mxu0 0.0
    %387 = vmatpush1.msra.mxu0 0.0
    %388 = vmatprep.subr.mxu0 0.0
    %389 = vmatpush1.msra.mxu0 0.0
    %390 = vmatprep.subr.mxu0 0.0
    %391 = vmatpush1.msra.mxu0 0.0
    %392 = vmatprep.subr.mxu0 0.0
    %393 = vmatpush1.msra.mxu0 0.0
    %394 = vmatprep.subr.mxu0 0.0
    %395 = vmatpush1.msra.mxu0 0.0
    %396 = vmatprep.subr.mxu0 0.0
    %397 = vmatpush1.msra.mxu0 0.0
    %398 = vmatprep.subr.mxu0 0.0
    %399 = vmatpush1.msra.mxu0 0.0
    %400 = vmatprep.subr.mxu0 0.0
    %401 = vmatpush1.msra.mxu0 0.0
    %402 = vmatprep.subr.mxu0 0.0
    %403 = vmatpush1.msra.mxu0 0.0
    %404 = vmatprep.subr.mxu0 0.0
    %405 = vmatpush1.msra.mxu0 0.0
    %406 = vmatprep.subr.mxu0 0.0
    %407 = vmatpush1.msra.mxu0 0.0
    %408 = vmatprep.subr.mxu0 0.0
    %409 = vmatpush1.msra.mxu0 0.0
    %410 = vmatprep.subr.mxu0 0.0
    %411 = vmatpush1.msra.mxu0 0.0
    %412 = vmatprep.subr.mxu0 0.0
    %413 = vmatpush1.msra.mxu0 0.0
    %414 = vmatprep.subr.mxu0 0.0
    %415 = vmatpush1.msra.mxu0 0.0
    %416 = vmatprep.subr.mxu0 0.0
    %417 = vmatpush1.msra.mxu0 0.0
    %418 = vmatprep.subr.mxu0 0.0
    %419 = vmatpush1.msra.mxu0 0.0
    %420 = vmatprep.subr.mxu0 0.0
    %421 = vmatpush1.msra.mxu0 0.0
    %422 = vmatprep.subr.mxu0 0.0
    %423 = vmatpush1.msra.mxu0 0.0
    %424 = vmatprep.subr.mxu0 0.0
    %425 = vmatpush1.msra.mxu0 0.0
    %426 = vmatprep.subr.mxu0 0.0
    %427 = vmatpush1.msra.mxu0 0.0
    %428 = vmatprep.subr.mxu0 0.0
    %429 = vmatpush1.msra.mxu0 0.0
    %430 = vmatprep.subr.mxu0 0.0
    %431 = vmatpush1.msra.mxu0 0.0
    %432 = vmatprep.subr.mxu0 0.0
    %433 = vmatpush1.msra.mxu0 0.0
    %434 = vmatprep.subr.mxu0 0.0
    %435 = vmatpush1.msra.mxu0 0.0
    %436 = vmatprep.subr.mxu0 0.0
    %437 = vmatpush1.msra.mxu0 0.0
    %438 = vmatprep.mubr.f32.mxu0 0.0
    %439 = vmatmul.mubr.f32.gmra.mrb[0].mxu0 %v359
    %v440 = vpop.f32.mrb[0].mxu0
    %v441 = vadd.f32 0.0, %v440
    %v442 = vpop.f32.mrb[0].mxu0
    %443 = vmatprep.mubr.f32.mxu0 0.0
    %444 = vmatmul.mubr.f32.gmra.mrb[0].mxu0 %v362
    %v445 = vpop.f32.mrb[0].mxu0
    %v446 = vadd.f32 0.0, %v445
    %v447 = vpop.f32.mrb[0].mxu0
    %448 = vmatprep.mubr.f32.mxu0 0.0
    %449 = vmatmul.mubr.f32.gmra.mrb[0].mxu0 %v365
    %v450 = vpop.f32.mrb[0].mxu0
    %v451 = vadd.f32 0.0, %v450
    %v452 = vpop.f32.mrb[0].mxu0
    %453 = vmatprep.mubr.f32.mxu0 0.0
    %454 = vmatmul.mubr.f32.gmra.mrb[0].mxu0 %v368
    %v455 = vpop.f32.mrb[0].mxu0
    %v456 = vadd.f32 0.0, %v455
    %v457 = vpop.f32.mrb[0].mxu0
    %458 = vdwg.mxu0
    %v459 = vadd.f32 %v349, %v441
    %v460 = vadd.f32 %v350, %v446
    %v461 = vadd.f32 %v351, %v451
    %v462 = vadd.f32 %v352, %v456
    %v463 = vmax.f32 %v459, 0.0
    %v464 = vmax.f32 %v460, 0.0
    %v465 = vmax.f32 %v461, 0.0
    %v466 = vmax.f32 %v462, 0.0
    %v467 = vld [vmem:[%s7] sm:$0xff]
    %v468 = vld [vmem:[%s7 + $0x8] sm:$0xff]
    %v469 = vld [vmem:[%s8] sm:$0xff]
    %v470 = vld [vmem:[%s8 + $0x8] sm:$0xff]
    %v472 = vsel %vm357, %v469, 0
    %v475 = vsel %vm357, %v470, 0
    %477 = vmatprep.subr.mxu0 0.0
    %478 = vmatpush1.msra.mxu0 %v372
    %479 = vmatprep.subr.mxu0 0.0
    %480 = vmatpush1.msra.mxu0 0.0
    %481 = vmatprep.subr.mxu0 0.0
    %482 = vmatpush1.msra.mxu0 0.0
    %483 = vmatprep.subr.mxu0 0.0
    %484 = vmatpush1.msra.mxu0 0.0
    %485 = vmatprep.subr.mxu0 0.0
    %486 = vmatpush1.msra.mxu0 0.0
    %487 = vmatprep.subr.mxu0 0.0
    %488 = vmatpush1.msra.mxu0 0.0
    %489 = vmatprep.subr.mxu0 0.0
    %490 = vmatpush1.msra.mxu0 0.0
    %491 = vmatprep.subr.mxu0 0.0
    %492 = vmatpush1.msra.mxu0 0.0
    %493 = vmatprep.subr.mxu0 0.0
    %494 = vmatpush1.msra.mxu0 0.0
    %495 = vmatprep.subr.mxu0 0.0
    %496 = vmatpush1.msra.mxu0 0.0
    %497 = vmatprep.subr.mxu0 0.0
    %498 = vmatpush1.msra.mxu0 0.0
    %499 = vmatprep.subr.mxu0 0.0
    %500 = vmatpush1.msra.mxu0 0.0
    %501 = vmatprep.subr.mxu0 0.0
    %502 = vmatpush1.msra.mxu0 0.0
    %503 = vmatprep.subr.mxu0 0.0
    %504 = vmatpush1.msra.mxu0 0.0
    %505 = vmatprep.subr.mxu0 0.0
    %506 = vmatpush1.msra.mxu0 0.0
    %507 = vmatprep.subr.mxu0 0.0
    %508 = vmatpush1.msra.mxu0 0.0
    %509 = vmatprep.subr.mxu0 0.0
    %510 = vmatpush1.msra.mxu0 0.0
    %511 = vmatprep.subr.mxu0 0.0
    %512 = vmatpush1.msra.mxu0 0.0
    %513 = vmatprep.subr.mxu0 0.0
    %514 = vmatpush1.msra.mxu0 0.0
    %515 = vmatprep.subr.mxu0 0.0
    %516 = vmatpush1.msra.mxu0 0.0
    %517 = vmatprep.subr.mxu0 0.0
    %518 = vmatpush1.msra.mxu0 0.0
    %519 = vmatprep.subr.mxu0 0.0
    %520 = vmatpush1.msra.mxu0 0.0
    %521 = vmatprep.subr.mxu0 0.0
    %522 = vmatpush1.msra.mxu0 0.0
    %523 = vmatprep.subr.mxu0 0.0
    %524 = vmatpush1.msra.mxu0 0.0
    %525 = vmatprep.subr.mxu0 0.0
    %526 = vmatpush1.msra.mxu0 0.0
    %527 = vmatprep.subr.mxu0 0.0
    %528 = vmatpush1.msra.mxu0 0.0
    %529 = vmatprep.subr.mxu0 0.0
    %530 = vmatpush1.msra.mxu0 0.0
    %531 = vmatprep.subr.mxu0 0.0
    %532 = vmatpush1.msra.mxu0 0.0
    %533 = vmatprep.subr.mxu0 0.0
    %534 = vmatpush1.msra.mxu0 0.0
    %535 = vmatprep.subr.mxu0 0.0
    %536 = vmatpush1.msra.mxu0 0.0
    %537 = vmatprep.subr.mxu0 0.0
    %538 = vmatpush1.msra.mxu0 0.0
    %539 = vmatprep.subr.mxu0 0.0
    %540 = vmatpush1.msra.mxu0 0.0
    %541 = vmatprep.mubr.f32.mxu0 0.0
    %542 = vmatmul.mubr.f32.gmra.mrb[0].mxu0 %v472
    %v543 = vpop.f32.mrb[0].mxu0
    %v544 = vadd.f32 0.0, %v543
    %v545 = vpop.f32.mrb[0].mxu0
    %546 = vmatprep.mubr.f32.mxu0 0.0
    %547 = vmatmul.mubr.f32.gmra.mrb[0].mxu0 %v475
    %v548 = vpop.f32.mrb[0].mxu0
    %v549 = vadd.f32 0.0, %v548
    %v550 = vpop.f32.mrb[0].mxu0
    %551 = vdwg.mxu0
    %v553 = vsel %vm50, %v467, 0
    %v556 = vsel %vm50, %v468, 0
    %558 = vmatprep.subr.mxu0 0.0
    %559 = vmatpush1.msra.mxu0 %v463
    %560 = vmatprep.subr.mxu0 0.0
    %561 = vmatpush1.msra.mxu0 %v464
    %562 = vmatprep.subr.mxu0 0.0
    %563 = vmatpush1.msra.mxu0 %v465
    %564 = vmatprep.subr.mxu0 0.0
    %565 = vmatpush1.msra.mxu0 %v466
    %566 = vmatprep.subr.mxu0 0.0
    %567 = vmatpush1.msra.mxu0 0.0
    %568 = vmatprep.subr.mxu0 0.0
    %569 = vmatpush1.msra.mxu0 0.0
    %570 = vmatprep.subr.mxu0 0.0
    %571 = vmatpush1.msra.mxu0 0.0
    %572 = vmatprep.subr.mxu0 0.0
    %573 = vmatpush1.msra.mxu0 0.0
    %574 = vmatprep.subr.mxu0 0.0
    %575 = vmatpush1.msra.mxu0 0.0
    %576 = vmatprep.subr.mxu0 0.0
    %577 = vmatpush1.msra.mxu0 0.0
    %578 = vmatprep.subr.mxu0 0.0
    %579 = vmatpush1.msra.mxu0 0.0
    %580 = vmatprep.subr.mxu0 0.0
    %581 = vmatpush1.msra.mxu0 0.0
    %582 = vmatprep.subr.mxu0 0.0
    %583 = vmatpush1.msra.mxu0 0.0
    %584 = vmatprep.subr.mxu0 0.0
    %585 = vmatpush1.msra.mxu0 0.0
    %586 = vmatprep.subr.mxu0 0.0
    %587 = vmatpush1.msra.mxu0 0.0
    %588 = vmatprep.subr.mxu0 0.0
    %589 = vmatpush1.msra.mxu0 0.0
    %590 = vmatprep.subr.mxu0 0.0
    %591 = vmatpush1.msra.mxu0 0.0
    %592 = vmatprep.subr.mxu0 0.0
    %593 = vmatpush1.msra.mxu0 0.0
    %594 = vmatprep.subr.mxu0 0.0
    %595 = vmatpush1.msra.mxu0 0.0
    %596 = vmatprep.subr.mxu0 0.0
    %597 = vmatpush1.msra.mxu0 0.0
    %598 = vmatprep.subr.mxu0 0.0
    %599 = vmatpush1.msra.mxu0 0.0
    %600 = vmatprep.subr.mxu0 0.0
    %601 = vmatpush1.msra.mxu0 0.0
    %602 = vmatprep.subr.mxu0 0.0
    %603 = vmatpush1.msra.mxu0 0.0
    %604 = vmatprep.subr.mxu0 0.0
    %605 = vmatpush1.msra.mxu0 0.0
    %606 = vmatprep.subr.mxu0 0.0
    %607 = vmatpush1.msra.mxu0 0.0
    %608 = vmatprep.subr.mxu0 0.0
    %609 = vmatpush1.msra.mxu0 0.0
    %610 = vmatprep.subr.mxu0 0.0
    %611 = vmatpush1.msra.mxu0 0.0
    %612 = vmatprep.subr.mxu0 0.0
    %613 = vmatpush1.msra.mxu0 0.0
    %614 = vmatprep.subr.mxu0 0.0
    %615 = vmatpush1.msra.mxu0 0.0
    %616 = vmatprep.subr.mxu0 0.0
    %617 = vmatpush1.msra.mxu0 0.0
    %618 = vmatprep.subr.mxu0 0.0
    %619 = vmatpush1.msra.mxu0 0.0
    %620 = vmatprep.subr.mxu0 0.0
    %621 = vmatpush1.msra.mxu0 0.0
    %622 = vmatprep.mubr.f32.mxu0 0.0
    %623 = vmatmul.mubr.f32.gmra.mrb[0].mxu0 %v553
    %v624 = vpop.f32.mrb[0].mxu0
    %v625 = vadd.f32 %v544, %v624
    %v626 = vpop.f32.mrb[0].mxu0
    %627 = vmatprep.mubr.f32.mxu0 0.0
    %628 = vmatmul.mubr.f32.gmra.mrb[0].mxu0 %v556
    %v629 = vpop.f32.mrb[0].mxu0
    %v630 = vadd.f32 %v549, %v629
    %v631 = vpop.f32.mrb[0].mxu0
    %632 = vdwg.mxu0
    %v633 = vmax.f32 %v625, 0.0
    %v634 = vmax.f32 %v630, 0.0
    %v635 = vld [vmem:[%s9] sm:$0x1]
    %v637 = vsel %vm148, %v635, 0
    %639 = vmatprep.subr.mxu0 0.0
    %640 = vmatpush1.msra.mxu0 %v633
    %641 = vmatprep.subr.mxu0 0.0
    %642 = vmatpush1.msra.mxu0 %v634
    %643 = vmatprep.subr.mxu0 0.0
    %644 = vmatpush1.msra.mxu0 0.0
    %645 = vmatprep.subr.mxu0 0.0
    %646 = vmatpush1.msra.mxu0 0.0
    %647 = vmatprep.subr.mxu0 0.0
    %648 = vmatpush1.msra.mxu0 0.0
    %649 = vmatprep.subr.mxu0 0.0
    %650 = vmatpush1.msra.mxu0 0.0
    %651 = vmatprep.subr.mxu0 0.0
    %652 = vmatpush1.msra.mxu0 0.0
    %653 = vmatprep.subr.mxu0 0.0
    %654 = vmatpush1.msra.mxu0 0.0
    %655 = vmatprep.subr.mxu0 0.0
    %656 = vmatpush1.msra.mxu0 0.0
    %657 = vmatprep.subr.mxu0 0.0
    %658 = vmatpush1.msra.mxu0 0.0
    %659 = vmatprep.subr.mxu0 0.0
    %660 = vmatpush1.msra.mxu0 0.0
    %661 = vmatprep.subr.mxu0 0.0
    %662 = vmatpush1.msra.mxu0 0.0
    %663 = vmatprep.subr.mxu0 0.0
    %664 = vmatpush1.msra.mxu0 0.0
    %665 = vmatprep.subr.mxu0 0.0
    %666 = vmatpush1.msra.mxu0 0.0
    %667 = vmatprep.subr.mxu0 0.0
    %668 = vmatpush1.msra.mxu0 0.0
    %669 = vmatprep.subr.mxu0 0.0
    %670 = vmatpush1.msra.mxu0 0.0
    %671 = vmatprep.subr.mxu0 0.0
    %672 = vmatpush1.msra.mxu0 0.0
    %673 = vmatprep.subr.mxu0 0.0
    %674 = vmatpush1.msra.mxu0 0.0
    %675 = vmatprep.subr.mxu0 0.0
    %676 = vmatpush1.msra.mxu0 0.0
    %677 = vmatprep.subr.mxu0 0.0
    %678 = vmatpush1.msra.mxu0 0.0
    %679 = vmatprep.subr.mxu0 0.0
    %680 = vmatpush1.msra.mxu0 0.0
    %681 = vmatprep.subr.mxu0 0.0
    %682 = vmatpush1.msra.mxu0 0.0
    %683 = vmatprep.subr.mxu0 0.0
    %684 = vmatpush1.msra.mxu0 0.0
    %685 = vmatprep.subr.mxu0 0.0
    %686 = vmatpush1.msra.mxu0 0.0
    %687 = vmatprep.subr.mxu0 0.0
    %688 = vmatpush1.msra.mxu0 0.0
    %689 = vmatprep.subr.mxu0 0.0
    %690 = vmatpush1.msra.mxu0 0.0
    %691 = vmatprep.subr.mxu0 0.0
    %692 = vmatpush1.msra.mxu0 0.0
    %693 = vmatprep.subr.mxu0 0.0
    %694 = vmatpush1.msra.mxu0 0.0
    %695 = vmatprep.subr.mxu0 0.0
    %696 = vmatpush1.msra.mxu0 0.0
    %697 = vmatprep.subr.mxu0 0.0
    %698 = vmatpush1.msra.mxu0 0.0
    %699 = vmatprep.subr.mxu0 0.0
    %700 = vmatpush1.msra.mxu0 0.0
    %701 = vmatprep.subr.mxu0 0.0
    %702 = vmatpush1.msra.mxu0 0.0
    %703 = vmatprep.mubr.f32.mxu0 0.0
    %704 = vmatmul.mubr.f32.gmra.mrb[0].mxu0 %v637
    %v705 = vpop.f32.mrb[0].mxu0
    %v706 = vadd.f32 0.0, %v705
    %v707 = vpop.f32.mrb[0].mxu0
    %708 = vdwg.mxu0
    %v709 = vxor.u32 %v706, 2147483648
    %v710 = vmul.f32 %v709, 1.442695
    %v711 = vpow.pop %v710
    %v712 = vadd.f32 %v711, 1.0
    %v713 = vrcp.pop %v712
    %v714 = vmul.f32 1.0, %v713
    %715 = vst [vmem:[#allocation2] sm:$0x1] %v714
    // Predicated region
    $region42: #{tpu_custom_call.1} parent=1 // pred_check
      _
    $region43: #{tpu_custom_call.1} parent=1 // pred_check_branch
      %717 = sbr.rel (0) target = $region45
    $region44: #{tpu_custom_call.1} parent=1 // pred_region
      %s719 = ssub.s32 16, 16
      %720 = vsyncadd [#allocation3], %s719
      %s722 = sshll.u32 [#allocation2], 4
      %s723 = int_to_ptr.vmem [resolvable:$true] %s722
      %725 = dma.vmem_to_hbm [thread:$0]  %s723, 16, %s10, [#allocation3]
    $region45: #{tpu_custom_call.1} parent=1 // pred_fallthru
      _
    // Predicated region
    $region46: #{tpu_custom_call.1} parent=1 // pred_check
      _
    $region47: #{tpu_custom_call.1} parent=1 // pred_check_branch
      %727 = sbr.rel (0) target = $region49
    $region48: #{tpu_custom_call.1} parent=1 // pred_region
      %728 = dma.done [#allocation3], 16
    $region49: #{tpu_custom_call.1} parent=1 // pred_fallthru
      _
    %729 = vsyncpa [#allocation3], 1

</llo_original>
